<compile_context>
chip_gen: v7x
topology: tpu7x:2x2x1
jax: 0.10.0
libtpu: 0.0.40
codegen_flags: <defaults>
</compile_context>

<pallas_src>
import functools

import jax
import jax.numpy as jnp
from jax.experimental import pallas as pl
from jax.experimental.pallas import tpu as pltpu

_LANE = 128


def _round_up(v, m):
    return (v + m - 1) // m * m


def _ebm_kernel(x_ref, w0_ref, b0_ref, w1_ref, b1_ref, w2_ref, b2_ref, out_ref,
                *, matmul_dtype, act_dtype):
    # prenorm == 'tanh' (EUP). Optionally run the transcendental in bf16
    # (v6e/v7x packed-bf16 EUP gives ~2x throughput); keep f32 on v5e.
    x = jnp.tanh(x_ref[...].astype(act_dtype)).astype(jnp.float32)

    def swish(v):
        # v * sigmoid(v); sigmoid on EUP (optionally bf16), multiply on VPU.
        s = jax.nn.sigmoid(v.astype(act_dtype)).astype(jnp.float32)
        return v * s

    # layer0: (TB, F) @ (F, F) + (1, F), swish. Dropout -> identity (eval).
    h0 = jnp.dot(x.astype(matmul_dtype), w0_ref[...],
                 preferred_element_type=jnp.float32)
    h0 = swish(h0 + b0_ref[...].astype(jnp.float32))

    # layer1: (TB, F) @ (F, 128) + (1, 128), swish.
    h1 = jnp.dot(h0.astype(matmul_dtype), w1_ref[...],
                 preferred_element_type=jnp.float32)
    h1 = swish(h1 + b1_ref[...].astype(jnp.float32))

    # layer2: out_features == 1 -> skip the degenerate N=1 MXU matmul; do a
    # VPU multiply + XLU lane reduce. b2 is a scalar read from SMEM.
    w2_row = w2_ref[...].astype(jnp.float32)                    # (1, 128)
    e = jnp.sum(h1 * w2_row, axis=-1) + b2_ref[0, 0]            # (TB,) lane-major

    # energy_type == 'sigmoid'; store lane-dense as a (1, TB) row.
    out_ref[...] = jax.nn.sigmoid(e).reshape(out_ref.shape).astype(out_ref.dtype)


def ebm_forward(x, params, *, tile_b_max=8192,
                use_bf16_matmul=True, use_bf16_act=False):
    """x: (B, F) float32 (bf16 also accepted — no wrapper-side cast is added).

    params: dict with
      w0: (F, F)   pre-transposed (in, out)     b0: (1, F)
      w1: (F, 128) pre-transposed (in, out)     b1: (1, 128)
      w2: (1, 128) PyTorch-native (out, in)     b2: (1, 1)

    use_bf16_matmul: bf16 MXU operands, f32 accumulation (default; ~3e-2 abs).
    use_bf16_act:    run tanh/sigmoid in bf16 (v6e/v7x EUP lever; keep False
                     on v5e, whose EUP/VPU have no bf16 path).
    """
    B, F = x.shape
    H = params["w1"].shape[1]

    matmul_dtype = jnp.bfloat16 if use_bf16_matmul else jnp.float32
    act_dtype = jnp.bfloat16 if use_bf16_act else jnp.float32

    w0 = params["w0"].astype(matmul_dtype)
    w1 = params["w1"].astype(matmul_dtype)
    b0 = params["b0"].astype(jnp.float32)
    b1 = params["b1"].astype(jnp.float32)
    w2 = params["w2"].astype(jnp.float32)
    b2 = params["b2"].reshape(1, 1).astype(jnp.float32)

    # --- batch tiling policy ---------------------------------------------
    # tile_b must be a multiple of 128 (lane-dense output blocks). Aim for
    # >= 2 grid steps whenever the batch allows, so v7x's second TensorCore
    # gets work and the input DMA actually pipelines. Padded rows produce
    # finite garbage energies that are sliced off below (rows independent).
    b_al = _round_up(B, _LANE)
    max_tile = min(_round_up(max(tile_b_max, _LANE), _LANE), b_al)
    min_steps = 2 if b_al >= 2 * _LANE else 1
    steps = max(-(-b_al // max_tile), min_steps)
    tile_b = _round_up(-(-b_al // steps), _LANE)
    b_pad = steps * tile_b
    if b_pad != B:
        x = jnp.pad(x, ((0, b_pad - B), (0, 0)))

    def resident(shape):
        # Full-array VMEM block with constant index_map -> stays resident
        # across grid steps (no per-step re-DMA).
        return pl.BlockSpec(shape, lambda i: (0, 0))

    out = pl.pallas_call(
        functools.partial(_ebm_kernel,
                          matmul_dtype=matmul_dtype, act_dtype=act_dtype),
        out_shape=jax.ShapeDtypeStruct((steps, tile_b), jnp.float32),
        grid=(steps,),
        in_specs=[
            pl.BlockSpec((tile_b, F), lambda i: (i, 0)),        # x (batch-tiled)
            resident((F, F)),                                   # w0
            resident((1, F)),                                   # b0
            resident((F, H)),                                   # w1
            resident((1, H)),                                   # b1
            resident((1, H)),                                   # w2 row
            pl.BlockSpec(memory_space=pltpu.MemorySpace.SMEM),  # b2 scalar
        ],
        # Lane-dense output: one (1, tile_b) row per grid step -> unmasked vst.
        out_specs=pl.BlockSpec((1, tile_b), lambda i: (i, 0)),
        compiler_params=pltpu.CompilerParams(
            dimension_semantics=("parallel",),
            vmem_limit_bytes=64 * 1024 * 1024),
    )(x, w0, b0, w1, b1, w2, b2)

    # Back to the module's (B, 1) interface (contiguous reshape + slice).
    return out.reshape(b_pad, 1)[:B]


def init_params(key, feature_dim, hidden=128):
    """Deterministic parameter init (PyTorch-Linear-style uniform ranges)."""
    ks = jax.random.split(key, 6)

    def linear_t(kw, kb, fan_in, fan_out):
        bound = 1.0 / (fan_in ** 0.5)
        # Stored pre-transposed: (in, out) == PyTorch weight.T
        w = jax.random.uniform(kw, (fan_in, fan_out), jnp.float32, -bound, bound)
        b = jax.random.uniform(kb, (1, fan_out), jnp.float32, -bound, bound)
        return w, b

    w0, b0 = linear_t(ks[0], ks[1], feature_dim, feature_dim)
    w1, b1 = linear_t(ks[2], ks[3], feature_dim, hidden)
    # layer2 kept in PyTorch-native (out, in) = (1, hidden) layout (used as a
    # broadcast row inside the kernel).
    bound2 = 1.0 / (hidden ** 0.5)
    w2 = jax.random.uniform(ks[4], (1, hidden), jnp.float32, -bound2, bound2)
    b2 = jax.random.uniform(ks[5], (1, 1), jnp.float32, -bound2, bound2)
    return {"w0": w0, "b0": b0, "w1": w1, "b1": b1, "w2": w2, "b2": b2}


def ebm_reference(x, params):
    """Pure-JAX reference for correctness check (matches PyTorch eval forward)."""
    x = jnp.tanh(x)
    h0 = x @ params["w0"] + params["b0"]
    h0 = h0 * jax.nn.sigmoid(h0)
    h1 = h0 @ params["w1"] + params["b1"]
    h1 = h1 * jax.nn.sigmoid(h1)
    e = h1 @ params["w2"].T + params["b2"]
    return jax.nn.sigmoid(e)


if __name__ == "__main__":
    key = jax.random.PRNGKey(0)
    k_x, k_p = jax.random.split(key)

    B, F = 8, 32  # small demo shapes: batch=8, feature_dim=32
    x = jax.random.normal(k_x, (B, F), dtype=jnp.float32)
    params = init_params(k_p, F)

    ref = jax.block_until_ready(ebm_reference(x, params))

    # f32 path (exact parity with the PyTorch f32 module).
    out_f32 = jax.block_until_ready(ebm_forward(x, params, use_bf16_matmul=False))
    assert out_f32.shape == (B, 1), out_f32.shape
    assert jnp.allclose(out_f32, ref, atol=1e-5, rtol=1e-5), (out_f32, ref)

    # Default path: bf16 MXU operands, f32 accumulation & activations.
    out = jax.block_until_ready(ebm_forward(x, params))
    assert out.shape == (B, 1), out.shape
    assert jnp.allclose(out, ref, atol=5e-2), (out, ref)

    # bf16 transcendental path (v6e/v7x EUP lever).
    out_act = jax.block_until_ready(ebm_forward(x, params, use_bf16_act=True))
    assert jnp.allclose(out_act, ref, atol=1e-1), (out_act, ref)

    # Multi-tile grid + padding path (B not a multiple of the tile; grid=(2,)).
    B2 = 300
    x2 = jax.random.normal(jax.random.PRNGKey(1), (B2, F), dtype=jnp.float32)
    out2 = jax.block_until_ready(ebm_forward(x2, params, use_bf16_matmul=False))
    ref2 = jax.block_until_ready(ebm_reference(x2, params))
    assert out2.shape == (B2, 1), out2.shape
    assert jnp.allclose(out2, ref2, atol=1e-5, rtol=1e-5), (out2, ref2)

    print("KERNEL_OK")
</pallas_src>

<mosaic_0001>
module attributes {stable_mosaic.version = 11 : i64} {
  func.func @_ebm_kernel(%arg0: i32, %arg1: memref<128x32xf32, #tpu.memory_space<vmem>>, %arg2: memref<32x32xf32, #tpu.memory_space<vmem>>, %arg3: memref<1x32xf32, #tpu.memory_space<vmem>>, %arg4: memref<32x128xf32, #tpu.memory_space<vmem>>, %arg5: memref<1x128xf32, #tpu.memory_space<vmem>>, %arg6: memref<1x128xf32, #tpu.memory_space<vmem>>, %arg7: memref<1x1xf32, #tpu.memory_space<smem>>, %arg8: memref<1x128xf32, #tpu.memory_space<vmem>>) attributes {dimension_semantics = [#tpu.dimension_semantics<parallel>], iteration_bounds = array<i64: 1>, scalar_prefetch = 0 : i64, scratch_operands = 0 : i64, tpu.core_type = #tpu.core_type<tc>, window_params = [{transform_indices = @transform_0, window_bounds = array<i64: 128, 32>}, {pipeline_mode = #tpu.pipeline_mode<synchronous>, transform_indices = @transform_1, window_bounds = array<i64: 32, 32>}, {pipeline_mode = #tpu.pipeline_mode<synchronous>, transform_indices = @transform_2, window_bounds = array<i64: 1, 32>}, {pipeline_mode = #tpu.pipeline_mode<synchronous>, transform_indices = @transform_3, window_bounds = array<i64: 32, 128>}, {pipeline_mode = #tpu.pipeline_mode<synchronous>, transform_indices = @transform_4, window_bounds = array<i64: 1, 128>}, {pipeline_mode = #tpu.pipeline_mode<synchronous>, transform_indices = @transform_5, window_bounds = array<i64: 1, 128>}, {transform_indices = @transform_6, window_bounds = array<i64: 1, 1>}, {transform_indices = @transform_7, window_bounds = array<i64: 1, 128>}]} {
    %c0 = arith.constant 0 : index
    %c0_0 = arith.constant 0 : index
    %0 = vector.load %arg1[%c0, %c0_0] : memref<128x32xf32, #tpu.memory_space<vmem>>, vector<128x32xf32>
    %1 = math.tanh %0 : vector<128x32xf32>
    %c0_1 = arith.constant 0 : index
    %c0_2 = arith.constant 0 : index
    %2 = vector.load %arg2[%c0_1, %c0_2] : memref<32x32xf32, #tpu.memory_space<vmem>>, vector<32x32xf32>
    %cst = arith.constant dense<0.000000e+00> : vector<128x32xf32>
    %3 = tpu.matmul %1, %2, %cst {dimension_numbers = #tpu.dot_dimension_numbers<[1], [0], [0], [1], [0, 0, 1, 1], [], []>} : vector<128x32xf32>, vector<32x32xf32>, vector<128x32xf32> -> vector<128x32xf32>
    %c0_3 = arith.constant 0 : index
    %c0_4 = arith.constant 0 : index
    %4 = vector.load %arg3[%c0_3, %c0_4] : memref<1x32xf32, #tpu.memory_space<vmem>>, vector<1x32xf32>
    %5 = vector.broadcast %4 : vector<1x32xf32> to vector<128x32xf32>
    %6 = arith.addf %3, %5 : vector<128x32xf32>
    %7 = arith.negf %6 : vector<128x32xf32>
    %8 = math.exp %7 : vector<128x32xf32>
    %cst_5 = arith.constant 1.000000e+00 : f32
    %9 = vector.broadcast %cst_5 : f32 to vector<128x32xf32>
    %10 = arith.addf %9, %8 : vector<128x32xf32>
    %11 = arith.divf %9, %10 : vector<128x32xf32>
    %12 = arith.mulf %6, %11 : vector<128x32xf32>
    %c0_6 = arith.constant 0 : index
    %c0_7 = arith.constant 0 : index
    %13 = vector.load %arg4[%c0_6, %c0_7] : memref<32x128xf32, #tpu.memory_space<vmem>>, vector<32x128xf32>
    %cst_8 = arith.constant dense<0.000000e+00> : vector<128x128xf32>
    %14 = tpu.matmul %12, %13, %cst_8 {dimension_numbers = #tpu.dot_dimension_numbers<[1], [0], [0], [1], [0, 0, 1, 1], [], []>} : vector<128x32xf32>, vector<32x128xf32>, vector<128x128xf32> -> vector<128x128xf32>
    %c0_9 = arith.constant 0 : index
    %c0_10 = arith.constant 0 : index
    %15 = vector.load %arg5[%c0_9, %c0_10] : memref<1x128xf32, #tpu.memory_space<vmem>>, vector<1x128xf32>
    %16 = vector.broadcast %15 : vector<1x128xf32> to vector<128x128xf32>
    %17 = arith.addf %14, %16 : vector<128x128xf32>
    %18 = arith.negf %17 : vector<128x128xf32>
    %19 = math.exp %18 : vector<128x128xf32>
    %cst_11 = arith.constant 1.000000e+00 : f32
    %20 = vector.broadcast %cst_11 : f32 to vector<128x128xf32>
    %21 = arith.addf %20, %19 : vector<128x128xf32>
    %22 = arith.divf %20, %21 : vector<128x128xf32>
    %23 = arith.mulf %17, %22 : vector<128x128xf32>
    %c0_12 = arith.constant 0 : index
    %c0_13 = arith.constant 0 : index
    %24 = vector.load %arg6[%c0_12, %c0_13] : memref<1x128xf32, #tpu.memory_space<vmem>>, vector<1x128xf32>
    %25 = vector.broadcast %24 : vector<1x128xf32> to vector<128x128xf32>
    %26 = arith.mulf %23, %25 : vector<128x128xf32>
    %cst_14 = arith.constant dense<0.000000e+00> : vector<128xf32>
    %27 = vector.multi_reduction <add>, %26, %cst_14 [1] : vector<128x128xf32> to vector<128xf32>
    %c0_15 = arith.constant 0 : index
    %c0_16 = arith.constant 0 : index
    %28 = memref.load %arg7[%c0_15, %c0_16] : memref<1x1xf32, #tpu.memory_space<smem>>
    %29 = vector.broadcast %28 : f32 to vector<128xf32>
    %30 = arith.addf %27, %29 : vector<128xf32>
    %31 = arith.negf %30 : vector<128xf32>
    %32 = math.exp %31 : vector<128xf32>
    %cst_17 = arith.constant 1.000000e+00 : f32
    %33 = vector.broadcast %cst_17 : f32 to vector<128xf32>
    %34 = arith.addf %33, %32 : vector<128xf32>
    %35 = arith.divf %33, %34 : vector<128xf32>
    %36 = vector.shape_cast %35 : vector<128xf32> to vector<1x128xf32>
    %c0_18 = arith.constant 0 : index
    %c0_19 = arith.constant 0 : index
    %37 = vector.load %arg8[%c0_18, %c0_19] : memref<1x128xf32, #tpu.memory_space<vmem>>, vector<1x128xf32>
    tpu.vector_store %arg8[%c0_18, %c0_19], %36 {strides = array<i32>} : memref<1x128xf32, #tpu.memory_space<vmem>>, vector<1x128xf32>,
    return
  }
  func.func @transform_0(%arg0: i32) -> (i32, i32) {
    %c0_i32 = arith.constant 0 : i32
    %c0_i32_0 = arith.constant 0 : i32
    return %arg0, %c0_i32 : i32, i32
  }
  func.func @transform_1(%arg0: i32) -> (i32, i32) {
    %c0_i32 = arith.constant 0 : i32
    %c0_i32_0 = arith.constant 0 : i32
    %c0_i32_1 = arith.constant 0 : i32
    return %c0_i32, %c0_i32_0 : i32, i32
  }
  func.func @transform_2(%arg0: i32) -> (i32, i32) {
    %c0_i32 = arith.constant 0 : i32
    %c0_i32_0 = arith.constant 0 : i32
    %c0_i32_1 = arith.constant 0 : i32
    return %c0_i32, %c0_i32_0 : i32, i32
  }
  func.func @transform_3(%arg0: i32) -> (i32, i32) {
    %c0_i32 = arith.constant 0 : i32
    %c0_i32_0 = arith.constant 0 : i32
    %c0_i32_1 = arith.constant 0 : i32
    return %c0_i32, %c0_i32_0 : i32, i32
  }
  func.func @transform_4(%arg0: i32) -> (i32, i32) {
    %c0_i32 = arith.constant 0 : i32
    %c0_i32_0 = arith.constant 0 : i32
    %c0_i32_1 = arith.constant 0 : i32
    return %c0_i32, %c0_i32_0 : i32, i32
  }
  func.func @transform_5(%arg0: i32) -> (i32, i32) {
    %c0_i32 = arith.constant 0 : i32
    %c0_i32_0 = arith.constant 0 : i32
    %c0_i32_1 = arith.constant 0 : i32
    return %c0_i32, %c0_i32_0 : i32, i32
  }
  func.func @transform_6(%arg0: i32) -> (i32, i32) {
    %c0_i32 = arith.constant 0 : i32
    %c0_i32_0 = arith.constant 0 : i32
    %c0_i32_1 = arith.constant 0 : i32
    return %c0_i32, %c0_i32_0 : i32, i32
  }
  func.func @transform_7(%arg0: i32) -> (i32, i32) {
    %c0_i32 = arith.constant 0 : i32
    %c0_i32_0 = arith.constant 0 : i32
    return %arg0, %c0_i32 : i32, i32
  }
}

</mosaic_0001>

<llo_original>
// kernel: tpu_custom_call.1
$region0: #{tpu_custom_call.1}
  #allocation0 [shape = 'u32[]', space=smem, size = 0x4, offset = 0x4, fixed_abs, tag = 'smem constant byte address 0x4 - core index']
  #allocation1 [shape = 'u32[144,128]{1,0:T(1,128)}', space=vmem, size = 0x12000, scoped, tag = 'internal scratch']
  #allocation2 [shape = 'f32[1,1]{1,0:T(1,128)S(6)}', space=smem, size = 0x200, scoped, tag = 'scoped memory for tpu_custom_call.1']
  %s0 = inlined_call_operand.hbm [shape: f32[128,32], index: 0, kind: input, shape index: {}]
  %s1 = inlined_call_operand.hbm [shape: f32[32,32], index: 1, kind: input, shape index: {}]
  %s2 = inlined_call_operand.hbm [shape: f32[1,32], index: 2, kind: input, shape index: {}]
  %s3 = inlined_call_operand.hbm [shape: f32[32,128], index: 3, kind: input, shape index: {}]
  %s4 = inlined_call_operand.hbm [shape: f32[1,128], index: 4, kind: input, shape index: {}]
  %s5 = inlined_call_operand.hbm [shape: f32[1,128], index: 5, kind: input, shape index: {}]
  %s6 = inlined_call_operand.<no memory space> [shape: f32[1,1], index: 6, kind: input, shape index: {}]
  %s7 = inlined_call_operand.hbm [shape: f32[1,128], index: 7, kind: output, shape index: {}]
  %s8 = sld [smem:[#allocation0]]
  $region62: #{tpu_custom_call.1} parent=0
    _
  %s10 = ssub.s32 1, %s8
  %s11 = scalar_select 0, %s10, %s8
  %12 = sst [smem:[#allocation2]] %s6
  $region1: #{tpu_custom_call.1} parent=0
    #allocation3 [shape = 'u8[65536]{0}', space=vmem, size = 0x10000, scoped, tag = 'input window, operand 0, single buffered']
    #allocation4 [shape = 's32[1]{0}', space=sflag, size = 0x4, scoped, tag = 'scoped memory for tpu_custom_call.1']
    #allocation5 [shape = 's32[1]{0}', space=sflag, size = 0x4, scoped, tag = 'scoped memory for tpu_custom_call.1']
    #allocation6 [shape = 'u8[16384]{0}', space=vmem, size = 0x4000, scoped, tag = 'input window, operand 1, single buffered']
    #allocation7 [shape = 's32[1]{0}', space=sflag, size = 0x4, scoped, tag = 'scoped memory for tpu_custom_call.1']
    #allocation8 [shape = 'u8[512]{0}', space=vmem, size = 0x400, scoped, tag = 'input window, operand 2, single buffered']
    #allocation9 [shape = 'u8[16384]{0}', space=vmem, size = 0x4000, scoped, tag = 'input window, operand 3, single buffered']
    #allocation10 [shape = 's32[1]{0}', space=sflag, size = 0x4, scoped, tag = 'scoped memory for tpu_custom_call.1']
    #allocation11 [shape = 'u8[512]{0}', space=vmem, size = 0x400, scoped, tag = 'input window, operand 4, single buffered']
    #allocation12 [shape = 'u8[512]{0}', space=vmem, size = 0x400, scoped, tag = 'input window, operand 5, single buffered']
    #allocation13 [shape = 's32[1]{0}', space=sflag, size = 0x4, scoped, tag = 'scoped memory for tpu_custom_call.1']
    #allocation14 [shape = 'u8[512]{0}', space=vmem, size = 0x400, scoped, tag = 'output window, operand 0, single buffered']
    %13 = vsyncpa [#allocation4], 0
    %14 = vsyncpa [#allocation7], 0
    %15 = vsyncpa [#allocation10], 0
    %16 = vsyncpa [#allocation13], 0
    %17 = vsyncpa [#allocation5], 0
    // Predicated region
    $region2: #{tpu_custom_call.1} parent=1 // pred_check
      _
    $region3: #{tpu_custom_call.1} parent=1 // pred_check_branch
      %19 = sbr.rel (0) target = $region5
    $region4: #{tpu_custom_call.1} parent=1 // pred_region
      %s21 = ssub.s32 2048, 2048
      %22 = vsyncadd [#allocation4], %s21
      %s23 = sshll.u32 [#allocation3], 4
      %s24 = int_to_ptr.vmem [resolvable:$true] %s23
      %29 = dma.hbm_to_vmem [thread:$0]  %s0, 2048, %s24, [#allocation4], 128, 128, 8
    $region5: #{tpu_custom_call.1} parent=1 // pred_fallthru
      _
    // Predicated region
    $region6: #{tpu_custom_call.1} parent=1 // pred_check
      _
    $region7: #{tpu_custom_call.1} parent=1 // pred_check_branch
      %31 = sbr.rel (0) target = $region9
    $region8: #{tpu_custom_call.1} parent=1 // pred_region
      %s33 = ssub.s32 512, 512
      %34 = vsyncadd [#allocation7], %s33
      %s35 = sshll.u32 [#allocation6], 4
      %s36 = int_to_ptr.vmem [resolvable:$true] %s35
      %41 = dma.hbm_to_vmem [thread:$0]  %s1, 512, %s36, [#allocation7], 128, 128, 8
    $region9: #{tpu_custom_call.1} parent=1 // pred_fallthru
      _
    // Predicated region
    $region10: #{tpu_custom_call.1} parent=1 // pred_check
      _
    $region11: #{tpu_custom_call.1} parent=1 // pred_check_branch
      %43 = sbr.rel (0) target = $region13
    $region12: #{tpu_custom_call.1} parent=1 // pred_region
      %s45 = ssub.s32 16, 16
      %46 = vsyncadd [#allocation7], %s45
      %s48 = sshll.u32 [#allocation8], 4
      %s49 = int_to_ptr.vmem [resolvable:$true] %s48
      %51 = dma.hbm_to_vmem [thread:$0]  %s2, 16, %s49, [#allocation7]
    $region13: #{tpu_custom_call.1} parent=1 // pred_fallthru
      _
    // Predicated region
    $region14: #{tpu_custom_call.1} parent=1 // pred_check
      _
    $region15: #{tpu_custom_call.1} parent=1 // pred_check_branch
      %53 = sbr.rel (0) target = $region17
    $region16: #{tpu_custom_call.1} parent=1 // pred_region
      %s55 = ssub.s32 512, 512
      %56 = vsyncadd [#allocation10], %s55
      %s57 = sshll.u32 [#allocation9], 4
      %s58 = int_to_ptr.vmem [resolvable:$true] %s57
      %63 = dma.hbm_to_vmem [thread:$0]  %s3, 512, %s58, [#allocation10], 128, 128, 8
    $region17: #{tpu_custom_call.1} parent=1 // pred_fallthru
      _
    // Predicated region
    $region18: #{tpu_custom_call.1} parent=1 // pred_check
      _
    $region19: #{tpu_custom_call.1} parent=1 // pred_check_branch
      %65 = sbr.rel (0) target = $region21
    $region20: #{tpu_custom_call.1} parent=1 // pred_region
      %s67 = ssub.s32 16, 16
      %68 = vsyncadd [#allocation10], %s67
      %s70 = sshll.u32 [#allocation11], 4
      %s71 = int_to_ptr.vmem [resolvable:$true] %s70
      %73 = dma.hbm_to_vmem [thread:$0]  %s4, 16, %s71, [#allocation10]
    $region21: #{tpu_custom_call.1} parent=1 // pred_fallthru
      _
    // Predicated region
    $region22: #{tpu_custom_call.1} parent=1 // pred_check
      _
    $region23: #{tpu_custom_call.1} parent=1 // pred_check_branch
      %75 = sbr.rel (0) target = $region25
    $region24: #{tpu_custom_call.1} parent=1 // pred_region
      %s77 = ssub.s32 16, 16
      %78 = vsyncadd [#allocation13], %s77
      %s80 = sshll.u32 [#allocation12], 4
      %s81 = int_to_ptr.vmem [resolvable:$true] %s80
      %83 = dma.hbm_to_vmem [thread:$0]  %s5, 16, %s81, [#allocation13]
    $region25: #{tpu_custom_call.1} parent=1 // pred_fallthru
      _
    // Predicated region
    $region26: #{tpu_custom_call.1} parent=1 // pred_check
      _
    $region27: #{tpu_custom_call.1} parent=1 // pred_check_branch
      %85 = sbr.rel (0) target = $region29
    $region28: #{tpu_custom_call.1} parent=1 // pred_region
      _
    $region29: #{tpu_custom_call.1} parent=1 // pred_fallthru
      _
    // Predicated region
    $region30: #{tpu_custom_call.1} parent=1 // pred_check
      _
    $region31: #{tpu_custom_call.1} parent=1 // pred_check_branch
      %87 = sbr.rel (0) target = $region33
    $region32: #{tpu_custom_call.1} parent=1 // pred_region
      %88 = dma.done [#allocation4], 2048
    $region33: #{tpu_custom_call.1} parent=1 // pred_fallthru
      _
    // Predicated region
    $region34: #{tpu_custom_call.1} parent=1 // pred_check
      _
    $region35: #{tpu_custom_call.1} parent=1 // pred_check_branch
      %90 = sbr.rel (0) target = $region37
    $region36: #{tpu_custom_call.1} parent=1 // pred_region
      %91 = dma.done [#allocation7], 512
    $region37: #{tpu_custom_call.1} parent=1 // pred_fallthru
      _
    // Predicated region
    $region38: #{tpu_custom_call.1} parent=1 // pred_check
      _
    $region39: #{tpu_custom_call.1} parent=1 // pred_check_branch
      %93 = sbr.rel (0) target = $region41
    $region40: #{tpu_custom_call.1} parent=1 // pred_region
      %94 = dma.done [#allocation7], 16
    $region41: #{tpu_custom_call.1} parent=1 // pred_fallthru
      _
    // Predicated region
    $region42: #{tpu_custom_call.1} parent=1 // pred_check
      _
    $region43: #{tpu_custom_call.1} parent=1 // pred_check_branch
      %96 = sbr.rel (0) target = $region45
    $region44: #{tpu_custom_call.1} parent=1 // pred_region
      %97 = dma.done [#allocation10], 512
    $region45: #{tpu_custom_call.1} parent=1 // pred_fallthru
      _
    // Predicated region
    $region46: #{tpu_custom_call.1} parent=1 // pred_check
      _
    $region47: #{tpu_custom_call.1} parent=1 // pred_check_branch
      %99 = sbr.rel (0) target = $region49
    $region48: #{tpu_custom_call.1} parent=1 // pred_region
      %100 = dma.done [#allocation10], 16
    $region49: #{tpu_custom_call.1} parent=1 // pred_fallthru
      _
    // Predicated region
    $region50: #{tpu_custom_call.1} parent=1 // pred_check
      _
    $region51: #{tpu_custom_call.1} parent=1 // pred_check_branch
      %102 = sbr.rel (0) target = $region53
    $region52: #{tpu_custom_call.1} parent=1 // pred_region
      %103 = dma.done [#allocation13], 16
    $region53: #{tpu_custom_call.1} parent=1 // pred_fallthru
      _
    %v104 = vld [vmem:[#allocation3] sm:$0xff]
    %v105 = vld [vmem:[#allocation3 + $0x8] sm:$0xff]
    %v106 = vld [vmem:[#allocation3 + $0x10] sm:$0xff]
    %v107 = vld [vmem:[#allocation3 + $0x18] sm:$0xff]
    %v108 = vld [vmem:[#allocation3 + $0x20] sm:$0xff]
    %v109 = vld [vmem:[#allocation3 + $0x28] sm:$0xff]
    %v110 = vld [vmem:[#allocation3 + $0x30] sm:$0xff]
    %v111 = vld [vmem:[#allocation3 + $0x38] sm:$0xff]
    %v112 = vld [vmem:[#allocation3 + $0x40] sm:$0xff]
    %v113 = vld [vmem:[#allocation3 + $0x48] sm:$0xff]
    %v114 = vld [vmem:[#allocation3 + $0x50] sm:$0xff]
    %v115 = vld [vmem:[#allocation3 + $0x58] sm:$0xff]
    %v116 = vld [vmem:[#allocation3 + $0x60] sm:$0xff]
    %v117 = vld [vmem:[#allocation3 + $0x68] sm:$0xff]
    %v118 = vld [vmem:[#allocation3 + $0x70] sm:$0xff]
    %v119 = vld [vmem:[#allocation3 + $0x78] sm:$0xff]
    %v120 = vtanh.pop %v104
    %v121 = vtanh.pop %v105
    %v122 = vtanh.pop %v106
    %v123 = vtanh.pop %v107
    %v124 = vtanh.pop %v108
    %v125 = vtanh.pop %v109
    %v126 = vtanh.pop %v110
    %v127 = vtanh.pop %v111
    %v128 = vtanh.pop %v112
    %v129 = vtanh.pop %v113
    %v130 = vtanh.pop %v114
    %v131 = vtanh.pop %v115
    %v132 = vtanh.pop %v116
    %v133 = vtanh.pop %v117
    %v134 = vtanh.pop %v118
    %v135 = vtanh.pop %v119
    %v136 = vld [vmem:[#allocation6] sm:$0xff]
    %v137 = vld [vmem:[#allocation6 + $0x8] sm:$0xff]
    %v138 = vld [vmem:[#allocation6 + $0x10] sm:$0xff]
    %v139 = vld [vmem:[#allocation6 + $0x18] sm:$0xff]
    %v140 = vld [vmem:[#allocation8] sm:$0x1]
    %v142 = vlaneseq
    %v143 = vshrl.u32 %v142, 7
    %v144 = vsub.s32 0, %v143
    %v145 = vrot.slane %v140, %v144
    %vm147 = vcmask 261120
    %v149 = vsel %vm147, %v120, 0
    %v152 = vsel %vm147, %v121, 0
    %v155 = vsel %vm147, %v122, 0
    %v158 = vsel %vm147, %v123, 0
    %v161 = vsel %vm147, %v124, 0
    %v164 = vsel %vm147, %v125, 0
    %v167 = vsel %vm147, %v126, 0
    %v170 = vsel %vm147, %v127, 0
    %v173 = vsel %vm147, %v128, 0
    %v176 = vsel %vm147, %v129, 0
    %v179 = vsel %vm147, %v130, 0
    %v182 = vsel %vm147, %v131, 0
    %v185 = vsel %vm147, %v132, 0
    %v188 = vsel %vm147, %v133, 0
    %v191 = vsel %vm147, %v134, 0
    %v194 = vsel %vm147, %v135, 0
    %196 = vmatprep.subr.mxu0 0.0
    %197 = vmatpush1.msra.mxu0 %v136
    %198 = vmatprep.subr.mxu0 0.0
    %199 = vmatpush1.msra.mxu0 %v137
    %200 = vmatprep.subr.mxu0 0.0
    %201 = vmatpush1.msra.mxu0 %v138
    %202 = vmatprep.subr.mxu0 0.0
    %203 = vmatpush1.msra.mxu0 %v139
    %204 = vmatprep.subr.mxu0 0.0
    %205 = vmatpush1.msra.mxu0 0.0
    %206 = vmatprep.subr.mxu0 0.0
    %207 = vmatpush1.msra.mxu0 0.0
    %208 = vmatprep.subr.mxu0 0.0
    %209 = vmatpush1.msra.mxu0 0.0
    %210 = vmatprep.subr.mxu0 0.0
    %211 = vmatpush1.msra.mxu0 0.0
    %212 = vmatprep.subr.mxu0 0.0
    %213 = vmatpush1.msra.mxu0 0.0
    %214 = vmatprep.subr.mxu0 0.0
    %215 = vmatpush1.msra.mxu0 0.0
    %216 = vmatprep.subr.mxu0 0.0
    %217 = vmatpush1.msra.mxu0 0.0
    %218 = vmatprep.subr.mxu0 0.0
    %219 = vmatpush1.msra.mxu0 0.0
    %220 = vmatprep.subr.mxu0 0.0
    %221 = vmatpush1.msra.mxu0 0.0
    %222 = vmatprep.subr.mxu0 0.0
    %223 = vmatpush1.msra.mxu0 0.0
    %224 = vmatprep.subr.mxu0 0.0
    %225 = vmatpush1.msra.mxu0 0.0
    %226 = vmatprep.subr.mxu0 0.0
    %227 = vmatpush1.msra.mxu0 0.0
    %228 = vmatprep.subr.mxu0 0.0
    %229 = vmatpush1.msra.mxu0 0.0
    %230 = vmatprep.subr.mxu0 0.0
    %231 = vmatpush1.msra.mxu0 0.0
    %232 = vmatprep.subr.mxu0 0.0
    %233 = vmatpush1.msra.mxu0 0.0
    %234 = vmatprep.subr.mxu0 0.0
    %235 = vmatpush1.msra.mxu0 0.0
    %236 = vmatprep.subr.mxu0 0.0
    %237 = vmatpush1.msra.mxu0 0.0
    %238 = vmatprep.subr.mxu0 0.0
    %239 = vmatpush1.msra.mxu0 0.0
    %240 = vmatprep.subr.mxu0 0.0
    %241 = vmatpush1.msra.mxu0 0.0
    %242 = vmatprep.subr.mxu0 0.0
    %243 = vmatpush1.msra.mxu0 0.0
    %244 = vmatprep.subr.mxu0 0.0
    %245 = vmatpush1.msra.mxu0 0.0
    %246 = vmatprep.subr.mxu0 0.0
    %247 = vmatpush1.msra.mxu0 0.0
    %248 = vmatprep.subr.mxu0 0.0
    %249 = vmatpush1.msra.mxu0 0.0
    %250 = vmatprep.subr.mxu0 0.0
    %251 = vmatpush1.msra.mxu0 0.0
    %252 = vmatprep.subr.mxu0 0.0
    %253 = vmatpush1.msra.mxu0 0.0
    %254 = vmatprep.subr.mxu0 0.0
    %255 = vmatpush1.msra.mxu0 0.0
    %256 = vmatprep.subr.mxu0 0.0
    %257 = vmatpush1.msra.mxu0 0.0
    %258 = vmatprep.subr.mxu0 0.0
    %259 = vmatpush1.msra.mxu0 0.0
    %260 = vmatprep.mubr.f32.mxu0 0.0
    %261 = vmatmul.mubr.f32.gmra.mrb[0].mxu0 %v149
    %v262 = vpop.f32.mrb[0].mxu0
    %v263 = vadd.f32 %v145, %v262
    %v264 = vpop.f32.mrb[0].mxu0
    %265 = vmatprep.mubr.f32.mxu0 0.0
    %266 = vmatmul.mubr.f32.gmra.mrb[0].mxu0 %v152
    %v267 = vpop.f32.mrb[0].mxu0
    %v268 = vadd.f32 %v145, %v267
    %v269 = vpop.f32.mrb[0].mxu0
    %270 = vmatprep.mubr.f32.mxu0 0.0
    %271 = vmatmul.mubr.f32.gmra.mrb[0].mxu0 %v155
    %v272 = vpop.f32.mrb[0].mxu0
    %v273 = vadd.f32 %v145, %v272
    %v274 = vpop.f32.mrb[0].mxu0
    %275 = vmatprep.mubr.f32.mxu0 0.0
    %276 = vmatmul.mubr.f32.gmra.mrb[0].mxu0 %v158
    %v277 = vpop.f32.mrb[0].mxu0
    %v278 = vadd.f32 %v145, %v277
    %v279 = vpop.f32.mrb[0].mxu0
    %280 = vmatprep.mubr.f32.mxu0 0.0
    %281 = vmatmul.mubr.f32.gmra.mrb[0].mxu0 %v161
    %v282 = vpop.f32.mrb[0].mxu0
    %v283 = vadd.f32 %v145, %v282
    %v284 = vpop.f32.mrb[0].mxu0
    %285 = vmatprep.mubr.f32.mxu0 0.0
    %286 = vmatmul.mubr.f32.gmra.mrb[0].mxu0 %v164
    %v287 = vpop.f32.mrb[0].mxu0
    %v288 = vadd.f32 %v145, %v287
    %v289 = vpop.f32.mrb[0].mxu0
    %290 = vmatprep.mubr.f32.mxu0 0.0
    %291 = vmatmul.mubr.f32.gmra.mrb[0].mxu0 %v167
    %v292 = vpop.f32.mrb[0].mxu0
    %v293 = vadd.f32 %v145, %v292
    %v294 = vpop.f32.mrb[0].mxu0
    %295 = vmatprep.mubr.f32.mxu0 0.0
    %296 = vmatmul.mubr.f32.gmra.mrb[0].mxu0 %v170
    %v297 = vpop.f32.mrb[0].mxu0
    %v298 = vadd.f32 %v145, %v297
    %v299 = vpop.f32.mrb[0].mxu0
    %300 = vmatprep.mubr.f32.mxu0 0.0
    %301 = vmatmul.mubr.f32.gmra.mrb[0].mxu0 %v173
    %v302 = vpop.f32.mrb[0].mxu0
    %v303 = vadd.f32 %v145, %v302
    %v304 = vpop.f32.mrb[0].mxu0
    %305 = vmatprep.mubr.f32.mxu0 0.0
    %306 = vmatmul.mubr.f32.gmra.mrb[0].mxu0 %v176
    %v307 = vpop.f32.mrb[0].mxu0
    %v308 = vadd.f32 %v145, %v307
    %v309 = vpop.f32.mrb[0].mxu0
    %310 = vmatprep.mubr.f32.mxu0 0.0
    %311 = vmatmul.mubr.f32.gmra.mrb[0].mxu0 %v179
    %v312 = vpop.f32.mrb[0].mxu0
    %v313 = vadd.f32 %v145, %v312
    %v314 = vpop.f32.mrb[0].mxu0
    %315 = vmatprep.mubr.f32.mxu0 0.0
    %316 = vmatmul.mubr.f32.gmra.mrb[0].mxu0 %v182
    %v317 = vpop.f32.mrb[0].mxu0
    %v318 = vadd.f32 %v145, %v317
    %v319 = vpop.f32.mrb[0].mxu0
    %320 = vmatprep.mubr.f32.mxu0 0.0
    %321 = vmatmul.mubr.f32.gmra.mrb[0].mxu0 %v185
    %v322 = vpop.f32.mrb[0].mxu0
    %v323 = vadd.f32 %v145, %v322
    %v324 = vpop.f32.mrb[0].mxu0
    %325 = vmatprep.mubr.f32.mxu0 0.0
    %326 = vmatmul.mubr.f32.gmra.mrb[0].mxu0 %v188
    %v327 = vpop.f32.mrb[0].mxu0
    %v328 = vadd.f32 %v145, %v327
    %v329 = vpop.f32.mrb[0].mxu0
    %330 = vmatprep.mubr.f32.mxu0 0.0
    %331 = vmatmul.mubr.f32.gmra.mrb[0].mxu0 %v191
    %v332 = vpop.f32.mrb[0].mxu0
    %v333 = vadd.f32 %v145, %v332
    %v334 = vpop.f32.mrb[0].mxu0
    %335 = vmatprep.mubr.f32.mxu0 0.0
    %336 = vmatmul.mubr.f32.gmra.mrb[0].mxu0 %v194
    %v337 = vpop.f32.mrb[0].mxu0
    %v338 = vadd.f32 %v145, %v337
    %v339 = vpop.f32.mrb[0].mxu0
    %340 = vdwg.mxu0
    %v341 = vxor.u32 %v263, 2147483648
    %v342 = vxor.u32 %v268, 2147483648
    %v343 = vxor.u32 %v273, 2147483648
    %v344 = vxor.u32 %v278, 2147483648
    %v345 = vxor.u32 %v283, 2147483648
    %v346 = vxor.u32 %v288, 2147483648
    %v347 = vxor.u32 %v293, 2147483648
    %v348 = vxor.u32 %v298, 2147483648
    %v349 = vxor.u32 %v303, 2147483648
    %v350 = vxor.u32 %v308, 2147483648
    %v351 = vxor.u32 %v313, 2147483648
    %v352 = vxor.u32 %v318, 2147483648
    %v353 = vxor.u32 %v323, 2147483648
    %v354 = vxor.u32 %v328, 2147483648
    %v355 = vxor.u32 %v333, 2147483648
    %v356 = vxor.u32 %v338, 2147483648
    %v357 = vmul.f32 %v341, 1.442695
    %v358 = vpow.pop %v357
    %v359 = vmul.f32 %v342, 1.442695
    %v360 = vpow.pop %v359
    %v361 = vmul.f32 %v343, 1.442695
    %v362 = vpow.pop %v361
    %v363 = vmul.f32 %v344, 1.442695
    %v364 = vpow.pop %v363
    %v365 = vmul.f32 %v345, 1.442695
    %v366 = vpow.pop %v365
    %v367 = vmul.f32 %v346, 1.442695
    %v368 = vpow.pop %v367
    %v369 = vmul.f32 %v347, 1.442695
    %v370 = vpow.pop %v369
    %v371 = vmul.f32 %v348, 1.442695
    %v372 = vpow.pop %v371
    %v373 = vmul.f32 %v349, 1.442695
    %v374 = vpow.pop %v373
    %v375 = vmul.f32 %v350, 1.442695
    %v376 = vpow.pop %v375
    %v377 = vmul.f32 %v351, 1.442695
    %v378 = vpow.pop %v377
    %v379 = vmul.f32 %v352, 1.442695
    %v380 = vpow.pop %v379
    %v381 = vmul.f32 %v353, 1.442695
    %v382 = vpow.pop %v381
    %v383 = vmul.f32 %v354, 1.442695
    %v384 = vpow.pop %v383
    %v385 = vmul.f32 %v355, 1.442695
    %v386 = vpow.pop %v385
    %v387 = vmul.f32 %v356, 1.442695
    %v388 = vpow.pop %v387
    %v389 = vadd.f32 %v358, 1.0
    %v390 = vadd.f32 %v360, 1.0
    %v391 = vadd.f32 %v362, 1.0
    %v392 = vadd.f32 %v364, 1.0
    %v393 = vadd.f32 %v366, 1.0
    %v394 = vadd.f32 %v368, 1.0
    %v395 = vadd.f32 %v370, 1.0
    %v396 = vadd.f32 %v372, 1.0
    %v397 = vadd.f32 %v374, 1.0
    %v398 = vadd.f32 %v376, 1.0
    %v399 = vadd.f32 %v378, 1.0
    %v400 = vadd.f32 %v380, 1.0
    %v401 = vadd.f32 %v382, 1.0
    %v402 = vadd.f32 %v384, 1.0
    %v403 = vadd.f32 %v386, 1.0
    %v404 = vadd.f32 %v388, 1.0
    %v405 = vrcp.pop %v389
    %v406 = vmul.f32 1.0, %v405
    %v407 = vrcp.pop %v390
    %v408 = vmul.f32 1.0, %v407
    %v409 = vrcp.pop %v391
    %v410 = vmul.f32 1.0, %v409
    %v411 = vrcp.pop %v392
    %v412 = vmul.f32 1.0, %v411
    %v413 = vrcp.pop %v393
    %v414 = vmul.f32 1.0, %v413
    %v415 = vrcp.pop %v394
    %v416 = vmul.f32 1.0, %v415
    %v417 = vrcp.pop %v395
    %v418 = vmul.f32 1.0, %v417
    %v419 = vrcp.pop %v396
    %v420 = vmul.f32 1.0, %v419
    %v421 = vrcp.pop %v397
    %v422 = vmul.f32 1.0, %v421
    %v423 = vrcp.pop %v398
    %v424 = vmul.f32 1.0, %v423
    %v425 = vrcp.pop %v399
    %v426 = vmul.f32 1.0, %v425
    %v427 = vrcp.pop %v400
    %v428 = vmul.f32 1.0, %v427
    %v429 = vrcp.pop %v401
    %v430 = vmul.f32 1.0, %v429
    %v431 = vrcp.pop %v402
    %v432 = vmul.f32 1.0, %v431
    %v433 = vrcp.pop %v403
    %v434 = vmul.f32 1.0, %v433
    %v435 = vrcp.pop %v404
    %v436 = vmul.f32 1.0, %v435
    %v437 = vmul.f32 %v263, %v406
    %v438 = vmul.f32 %v268, %v408
    %v439 = vmul.f32 %v273, %v410
    %v440 = vmul.f32 %v278, %v412
    %v441 = vmul.f32 %v283, %v414
    %v442 = vmul.f32 %v288, %v416
    %v443 = vmul.f32 %v293, %v418
    %v444 = vmul.f32 %v298, %v420
    %v445 = vmul.f32 %v303, %v422
    %v446 = vmul.f32 %v308, %v424
    %v447 = vmul.f32 %v313, %v426
    %v448 = vmul.f32 %v318, %v428
    %v449 = vmul.f32 %v323, %v430
    %v450 = vmul.f32 %v328, %v432
    %v451 = vmul.f32 %v333, %v434
    %v452 = vmul.f32 %v338, %v436
    %v453 = vld [vmem:[#allocation9] sm:$0xff]
    %v454 = vld [vmem:[#allocation9 + $0x8] sm:$0xff]
    %v455 = vld [vmem:[#allocation9 + $0x10] sm:$0xff]
    %v456 = vld [vmem:[#allocation9 + $0x18] sm:$0xff]
    %v457 = vld [vmem:[#allocation11] sm:$0x1]
    %v459 = vlaneseq
    %v460 = vshrl.u32 %v459, 7
    %v461 = vsub.s32 0, %v460
    %v462 = vrot.slane %v457, %v461
    %v465 = vsel %vm147, %v437, 0
    %v468 = vsel %vm147, %v438, 0
    %v471 = vsel %vm147, %v439, 0
    %v474 = vsel %vm147, %v440, 0
    %v477 = vsel %vm147, %v441, 0
    %v480 = vsel %vm147, %v442, 0
    %v483 = vsel %vm147, %v443, 0
    %v486 = vsel %vm147, %v444, 0
    %v489 = vsel %vm147, %v445, 0
    %v492 = vsel %vm147, %v446, 0
    %v495 = vsel %vm147, %v447, 0
    %v498 = vsel %vm147, %v448, 0
    %v501 = vsel %vm147, %v449, 0
    %v504 = vsel %vm147, %v450, 0
    %v507 = vsel %vm147, %v451, 0
    %v510 = vsel %vm147, %v452, 0
    %512 = vmatprep.subr.mxu0 0.0
    %513 = vmatpush1.msra.mxu0 %v453
    %514 = vmatprep.subr.mxu0 0.0
    %515 = vmatpush1.msra.mxu0 %v454
    %516 = vmatprep.subr.mxu0 0.0
    %517 = vmatpush1.msra.mxu0 %v455
    %518 = vmatprep.subr.mxu0 0.0
    %519 = vmatpush1.msra.mxu0 %v456
    %520 = vmatprep.subr.mxu0 0.0
    %521 = vmatpush1.msra.mxu0 0.0
    %522 = vmatprep.subr.mxu0 0.0
    %523 = vmatpush1.msra.mxu0 0.0
    %524 = vmatprep.subr.mxu0 0.0
    %525 = vmatpush1.msra.mxu0 0.0
    %526 = vmatprep.subr.mxu0 0.0
    %527 = vmatpush1.msra.mxu0 0.0
    %528 = vmatprep.subr.mxu0 0.0
    %529 = vmatpush1.msra.mxu0 0.0
    %530 = vmatprep.subr.mxu0 0.0
    %531 = vmatpush1.msra.mxu0 0.0
    %532 = vmatprep.subr.mxu0 0.0
    %533 = vmatpush1.msra.mxu0 0.0
    %534 = vmatprep.subr.mxu0 0.0
    %535 = vmatpush1.msra.mxu0 0.0
    %536 = vmatprep.subr.mxu0 0.0
    %537 = vmatpush1.msra.mxu0 0.0
    %538 = vmatprep.subr.mxu0 0.0
    %539 = vmatpush1.msra.mxu0 0.0
    %540 = vmatprep.subr.mxu0 0.0
    %541 = vmatpush1.msra.mxu0 0.0
    %542 = vmatprep.subr.mxu0 0.0
    %543 = vmatpush1.msra.mxu0 0.0
    %544 = vmatprep.subr.mxu0 0.0
    %545 = vmatpush1.msra.mxu0 0.0
    %546 = vmatprep.subr.mxu0 0.0
    %547 = vmatpush1.msra.mxu0 0.0
    %548 = vmatprep.subr.mxu0 0.0
    %549 = vmatpush1.msra.mxu0 0.0
    %550 = vmatprep.subr.mxu0 0.0
    %551 = vmatpush1.msra.mxu0 0.0
    %552 = vmatprep.subr.mxu0 0.0
    %553 = vmatpush1.msra.mxu0 0.0
    %554 = vmatprep.subr.mxu0 0.0
    %555 = vmatpush1.msra.mxu0 0.0
    %556 = vmatprep.subr.mxu0 0.0
    %557 = vmatpush1.msra.mxu0 0.0
    %558 = vmatprep.subr.mxu0 0.0
    %559 = vmatpush1.msra.mxu0 0.0
    %560 = vmatprep.subr.mxu0 0.0
    %561 = vmatpush1.msra.mxu0 0.0
    %562 = vmatprep.subr.mxu0 0.0
    %563 = vmatpush1.msra.mxu0 0.0
    %564 = vmatprep.subr.mxu0 0.0
    %565 = vmatpush1.msra.mxu0 0.0
    %566 = vmatprep.subr.mxu0 0.0
    %567 = vmatpush1.msra.mxu0 0.0
    %568 = vmatprep.subr.mxu0 0.0
    %569 = vmatpush1.msra.mxu0 0.0
    %570 = vmatprep.subr.mxu0 0.0
    %571 = vmatpush1.msra.mxu0 0.0
    %572 = vmatprep.subr.mxu0 0.0
    %573 = vmatpush1.msra.mxu0 0.0
    %574 = vmatprep.subr.mxu0 0.0
    %575 = vmatpush1.msra.mxu0 0.0
    %576 = vmatprep.mubr.f32.mxu0 0.0
    %577 = vmatmul.mubr.f32.gmra.mrb[0].mxu0 %v465
    %v578 = vpop.f32.mrb[0].mxu0
    %v579 = vadd.f32 %v462, %v578
    %v580 = vpop.f32.mrb[0].mxu0
    %581 = vmatprep.mubr.f32.mxu0 0.0
    %582 = vmatmul.mubr.f32.gmra.mrb[0].mxu0 %v468
    %v583 = vpop.f32.mrb[0].mxu0
    %v584 = vadd.f32 %v462, %v583
    %v585 = vpop.f32.mrb[0].mxu0
    %586 = vmatprep.mubr.f32.mxu0 0.0
    %587 = vmatmul.mubr.f32.gmra.mrb[0].mxu0 %v471
    %v588 = vpop.f32.mrb[0].mxu0
    %v589 = vadd.f32 %v462, %v588
    %v590 = vpop.f32.mrb[0].mxu0
    %591 = vmatprep.mubr.f32.mxu0 0.0
    %592 = vmatmul.mubr.f32.gmra.mrb[0].mxu0 %v474
    %v593 = vpop.f32.mrb[0].mxu0
    %v594 = vadd.f32 %v462, %v593
    %v595 = vpop.f32.mrb[0].mxu0
    %596 = vmatprep.mubr.f32.mxu0 0.0
    %597 = vmatmul.mubr.f32.gmra.mrb[0].mxu0 %v477
    %v598 = vpop.f32.mrb[0].mxu0
    %v599 = vadd.f32 %v462, %v598
    %v600 = vpop.f32.mrb[0].mxu0
    %601 = vmatprep.mubr.f32.mxu0 0.0
    %602 = vmatmul.mubr.f32.gmra.mrb[0].mxu0 %v480
    %v603 = vpop.f32.mrb[0].mxu0
    %v604 = vadd.f32 %v462, %v603
    %v605 = vpop.f32.mrb[0].mxu0
    %606 = vmatprep.mubr.f32.mxu0 0.0
    %607 = vmatmul.mubr.f32.gmra.mrb[0].mxu0 %v483
    %v608 = vpop.f32.mrb[0].mxu0
    %v609 = vadd.f32 %v462, %v608
    %v610 = vpop.f32.mrb[0].mxu0
    %611 = vmatprep.mubr.f32.mxu0 0.0
    %612 = vmatmul.mubr.f32.gmra.mrb[0].mxu0 %v486
    %v613 = vpop.f32.mrb[0].mxu0
    %v614 = vadd.f32 %v462, %v613
    %v615 = vpop.f32.mrb[0].mxu0
    %616 = vmatprep.mubr.f32.mxu0 0.0
    %617 = vmatmul.mubr.f32.gmra.mrb[0].mxu0 %v489
    %v618 = vpop.f32.mrb[0].mxu0
    %v619 = vadd.f32 %v462, %v618
    %v620 = vpop.f32.mrb[0].mxu0
    %621 = vmatprep.mubr.f32.mxu0 0.0
    %622 = vmatmul.mubr.f32.gmra.mrb[0].mxu0 %v492
    %v623 = vpop.f32.mrb[0].mxu0
    %v624 = vadd.f32 %v462, %v623
    %v625 = vpop.f32.mrb[0].mxu0
    %626 = vmatprep.mubr.f32.mxu0 0.0
    %627 = vmatmul.mubr.f32.gmra.mrb[0].mxu0 %v495
    %v628 = vpop.f32.mrb[0].mxu0
    %v629 = vadd.f32 %v462, %v628
    %v630 = vpop.f32.mrb[0].mxu0
    %631 = vmatprep.mubr.f32.mxu0 0.0
    %632 = vmatmul.mubr.f32.gmra.mrb[0].mxu0 %v498
    %v633 = vpop.f32.mrb[0].mxu0
    %v634 = vadd.f32 %v462, %v633
    %v635 = vpop.f32.mrb[0].mxu0
    %636 = vmatprep.mubr.f32.mxu0 0.0
    %637 = vmatmul.mubr.f32.gmra.mrb[0].mxu0 %v501
    %v638 = vpop.f32.mrb[0].mxu0
    %v639 = vadd.f32 %v462, %v638
    %v640 = vpop.f32.mrb[0].mxu0
    %641 = vmatprep.mubr.f32.mxu0 0.0
    %642 = vmatmul.mubr.f32.gmra.mrb[0].mxu0 %v504
    %v643 = vpop.f32.mrb[0].mxu0
    %v644 = vadd.f32 %v462, %v643
    %v645 = vpop.f32.mrb[0].mxu0
    %646 = vmatprep.mubr.f32.mxu0 0.0
    %647 = vmatmul.mubr.f32.gmra.mrb[0].mxu0 %v507
    %v648 = vpop.f32.mrb[0].mxu0
    %v649 = vadd.f32 %v462, %v648
    %v650 = vpop.f32.mrb[0].mxu0
    %651 = vmatprep.mubr.f32.mxu0 0.0
    %652 = vmatmul.mubr.f32.gmra.mrb[0].mxu0 %v510
    %v653 = vpop.f32.mrb[0].mxu0
    %v654 = vadd.f32 %v462, %v653
    %v655 = vpop.f32.mrb[0].mxu0
    %656 = vdwg.mxu0
    %v657 = vxor.u32 %v579, 2147483648
    %v658 = vxor.u32 %v584, 2147483648
    %v659 = vxor.u32 %v589, 2147483648
    %v660 = vxor.u32 %v594, 2147483648
    %v661 = vxor.u32 %v599, 2147483648
    %v662 = vxor.u32 %v604, 2147483648
    %v663 = vxor.u32 %v609, 2147483648
    %v664 = vxor.u32 %v614, 2147483648
    %v665 = vxor.u32 %v619, 2147483648
    %v666 = vxor.u32 %v624, 2147483648
    %v667 = vxor.u32 %v629, 2147483648
    %v668 = vxor.u32 %v634, 2147483648
    %v669 = vxor.u32 %v639, 2147483648
    %v670 = vxor.u32 %v644, 2147483648
    %v671 = vxor.u32 %v649, 2147483648
    %v672 = vxor.u32 %v654, 2147483648
    %v673 = vmul.f32 %v657, 1.442695
    %v674 = vpow.pop %v673
    %v675 = vmul.f32 %v658, 1.442695
    %v676 = vpow.pop %v675
    %v677 = vmul.f32 %v659, 1.442695
    %v678 = vpow.pop %v677
    %v679 = vmul.f32 %v660, 1.442695
    %v680 = vpow.pop %v679
    %v681 = vmul.f32 %v661, 1.442695
    %v682 = vpow.pop %v681
    %v683 = vmul.f32 %v662, 1.442695
    %v684 = vpow.pop %v683
    %v685 = vmul.f32 %v663, 1.442695
    %v686 = vpow.pop %v685
    %v687 = vmul.f32 %v664, 1.442695
    %v688 = vpow.pop %v687
    %v689 = vmul.f32 %v665, 1.442695
    %v690 = vpow.pop %v689
    %v691 = vmul.f32 %v666, 1.442695
    %v692 = vpow.pop %v691
    %v693 = vmul.f32 %v667, 1.442695
    %v694 = vpow.pop %v693
    %v695 = vmul.f32 %v668, 1.442695
    %v696 = vpow.pop %v695
    %v697 = vmul.f32 %v669, 1.442695
    %v698 = vpow.pop %v697
    %v699 = vmul.f32 %v670, 1.442695
    %v700 = vpow.pop %v699
    %v701 = vmul.f32 %v671, 1.442695
    %v702 = vpow.pop %v701
    %v703 = vmul.f32 %v672, 1.442695
    %v704 = vpow.pop %v703
    %v705 = vadd.f32 %v674, 1.0
    %v706 = vadd.f32 %v676, 1.0
    %v707 = vadd.f32 %v678, 1.0
    %v708 = vadd.f32 %v680, 1.0
    %v709 = vadd.f32 %v682, 1.0
    %v710 = vadd.f32 %v684, 1.0
    %v711 = vadd.f32 %v686, 1.0
    %v712 = vadd.f32 %v688, 1.0
    %v713 = vadd.f32 %v690, 1.0
    %v714 = vadd.f32 %v692, 1.0
    %v715 = vadd.f32 %v694, 1.0
    %v716 = vadd.f32 %v696, 1.0
    %v717 = vadd.f32 %v698, 1.0
    %v718 = vadd.f32 %v700, 1.0
    %v719 = vadd.f32 %v702, 1.0
    %v720 = vadd.f32 %v704, 1.0
    %v721 = vrcp.pop %v705
    %v722 = vmul.f32 1.0, %v721
    %v723 = vrcp.pop %v706
    %v724 = vmul.f32 1.0, %v723
    %v725 = vrcp.pop %v707
    %v726 = vmul.f32 1.0, %v725
    %v727 = vrcp.pop %v708
    %v728 = vmul.f32 1.0, %v727
    %v729 = vrcp.pop %v709
    %v730 = vmul.f32 1.0, %v729
    %v731 = vrcp.pop %v710
    %v732 = vmul.f32 1.0, %v731
    %v733 = vrcp.pop %v711
    %v734 = vmul.f32 1.0, %v733
    %v735 = vrcp.pop %v712
    %v736 = vmul.f32 1.0, %v735
    %v737 = vrcp.pop %v713
    %v738 = vmul.f32 1.0, %v737
    %v739 = vrcp.pop %v714
    %v740 = vmul.f32 1.0, %v739
    %v741 = vrcp.pop %v715
    %v742 = vmul.f32 1.0, %v741
    %v743 = vrcp.pop %v716
    %v744 = vmul.f32 1.0, %v743
    %v745 = vrcp.pop %v717
    %v746 = vmul.f32 1.0, %v745
    %v747 = vrcp.pop %v718
    %v748 = vmul.f32 1.0, %v747
    %v749 = vrcp.pop %v719
    %v750 = vmul.f32 1.0, %v749
    %v751 = vrcp.pop %v720
    %v752 = vmul.f32 1.0, %v751
    %v753 = vmul.f32 %v579, %v722
    %v754 = vmul.f32 %v584, %v724
    %v755 = vmul.f32 %v589, %v726
    %v756 = vmul.f32 %v594, %v728
    %v757 = vmul.f32 %v599, %v730
    %v758 = vmul.f32 %v604, %v732
    %v759 = vmul.f32 %v609, %v734
    %v760 = vmul.f32 %v614, %v736
    %v761 = vmul.f32 %v619, %v738
    %v762 = vmul.f32 %v624, %v740
    %v763 = vmul.f32 %v629, %v742
    %v764 = vmul.f32 %v634, %v744
    %v765 = vmul.f32 %v639, %v746
    %v766 = vmul.f32 %v644, %v748
    %v767 = vmul.f32 %v649, %v750
    %v768 = vmul.f32 %v654, %v752
    %v769 = vld [vmem:[#allocation12] sm:$0x1]
    %v771 = vlaneseq
    %v772 = vshrl.u32 %v771, 7
    %v773 = vsub.s32 0, %v772
    %v774 = vrot.slane %v769, %v773
    %v776 = vmul.f32 %v753, %v774
    %v777 = vmul.f32 %v754, %v774
    %v778 = vmul.f32 %v755, %v774
    %v779 = vmul.f32 %v756, %v774
    %v780 = vmul.f32 %v757, %v774
    %v781 = vmul.f32 %v758, %v774
    %v782 = vmul.f32 %v759, %v774
    %v783 = vmul.f32 %v760, %v774
    %v784 = vmul.f32 %v761, %v774
    %v785 = vmul.f32 %v762, %v774
    %v786 = vmul.f32 %v763, %v774
    %v787 = vmul.f32 %v764, %v774
    %v788 = vmul.f32 %v765, %v774
    %v789 = vmul.f32 %v766, %v774
    %v790 = vmul.f32 %v767, %v774
    %v791 = vmul.f32 %v768, %v774
    %792 = vadd.xlane.f32.xlu0 %v776
    %v793 = vpop.xlane.xlu0 %792
    %794 = vadd.xlane.f32.xlu0 %v777
    %v795 = vpop.xlane.xlu0 %794
    %796 = vadd.xlane.f32.xlu0 %v778
    %v797 = vpop.xlane.xlu0 %796
    %798 = vadd.xlane.f32.xlu0 %v779
    %v799 = vpop.xlane.xlu0 %798
    %800 = vadd.xlane.f32.xlu0 %v780
    %v801 = vpop.xlane.xlu0 %800
    %802 = vadd.xlane.f32.xlu0 %v781
    %v803 = vpop.xlane.xlu0 %802
    %804 = vadd.xlane.f32.xlu0 %v782
    %v805 = vpop.xlane.xlu0 %804
    %806 = vadd.xlane.f32.xlu0 %v783
    %v807 = vpop.xlane.xlu0 %806
    %808 = vadd.xlane.f32.xlu0 %v784
    %v809 = vpop.xlane.xlu0 %808
    %810 = vadd.xlane.f32.xlu0 %v785
    %v811 = vpop.xlane.xlu0 %810
    %812 = vadd.xlane.f32.xlu0 %v786
    %v813 = vpop.xlane.xlu0 %812
    %814 = vadd.xlane.f32.xlu0 %v787
    %v815 = vpop.xlane.xlu0 %814
    %816 = vadd.xlane.f32.xlu0 %v788
    %v817 = vpop.xlane.xlu0 %816
    %818 = vadd.xlane.f32.xlu0 %v789
    %v819 = vpop.xlane.xlu0 %818
    %820 = vadd.xlane.f32.xlu0 %v790
    %v821 = vpop.xlane.xlu0 %820
    %822 = vadd.xlane.f32.xlu0 %v791
    %v823 = vpop.xlane.xlu0 %822
    %s824 = sld [smem:[#allocation2]]
    %v825 = vstv %s824
    %v826 = vadd.f32 %v793, %v825
    %v827 = vadd.f32 %v795, %v825
    %v828 = vadd.f32 %v797, %v825
    %v829 = vadd.f32 %v799, %v825
    %v830 = vadd.f32 %v801, %v825
    %v831 = vadd.f32 %v803, %v825
    %v832 = vadd.f32 %v805, %v825
    %v833 = vadd.f32 %v807, %v825
    %v834 = vadd.f32 %v809, %v825
    %v835 = vadd.f32 %v811, %v825
    %v836 = vadd.f32 %v813, %v825
    %v837 = vadd.f32 %v815, %v825
    %v838 = vadd.f32 %v817, %v825
    %v839 = vadd.f32 %v819, %v825
    %v840 = vadd.f32 %v821, %v825
    %v841 = vadd.f32 %v823, %v825
    %v842 = vxor.u32 %v826, 2147483648
    %v843 = vxor.u32 %v827, 2147483648
    %v844 = vxor.u32 %v828, 2147483648
    %v845 = vxor.u32 %v829, 2147483648
    %v846 = vxor.u32 %v830, 2147483648
    %v847 = vxor.u32 %v831, 2147483648
    %v848 = vxor.u32 %v832, 2147483648
    %v849 = vxor.u32 %v833, 2147483648
    %v850 = vxor.u32 %v834, 2147483648
    %v851 = vxor.u32 %v835, 2147483648
    %v852 = vxor.u32 %v836, 2147483648
    %v853 = vxor.u32 %v837, 2147483648
    %v854 = vxor.u32 %v838, 2147483648
    %v855 = vxor.u32 %v839, 2147483648
    %v856 = vxor.u32 %v840, 2147483648
    %v857 = vxor.u32 %v841, 2147483648
    %v858 = vmul.f32 %v842, 1.442695
    %v859 = vpow.pop %v858
    %v860 = vmul.f32 %v843, 1.442695
    %v861 = vpow.pop %v860
    %v862 = vmul.f32 %v844, 1.442695
    %v863 = vpow.pop %v862
    %v864 = vmul.f32 %v845, 1.442695
    %v865 = vpow.pop %v864
    %v866 = vmul.f32 %v846, 1.442695
    %v867 = vpow.pop %v866
    %v868 = vmul.f32 %v847, 1.442695
    %v869 = vpow.pop %v868
    %v870 = vmul.f32 %v848, 1.442695
    %v871 = vpow.pop %v870
    %v872 = vmul.f32 %v849, 1.442695
    %v873 = vpow.pop %v872
    %v874 = vmul.f32 %v850, 1.442695
    %v875 = vpow.pop %v874
    %v876 = vmul.f32 %v851, 1.442695
    %v877 = vpow.pop %v876
    %v878 = vmul.f32 %v852, 1.442695
    %v879 = vpow.pop %v878
    %v880 = vmul.f32 %v853, 1.442695
    %v881 = vpow.pop %v880
    %v882 = vmul.f32 %v854, 1.442695
    %v883 = vpow.pop %v882
    %v884 = vmul.f32 %v855, 1.442695
    %v885 = vpow.pop %v884
    %v886 = vmul.f32 %v856, 1.442695
    %v887 = vpow.pop %v886
    %v888 = vmul.f32 %v857, 1.442695
    %v889 = vpow.pop %v888
    %v890 = vadd.f32 %v859, 1.0
    %v891 = vadd.f32 %v861, 1.0
    %v892 = vadd.f32 %v863, 1.0
    %v893 = vadd.f32 %v865, 1.0
    %v894 = vadd.f32 %v867, 1.0
    %v895 = vadd.f32 %v869, 1.0
    %v896 = vadd.f32 %v871, 1.0
    %v897 = vadd.f32 %v873, 1.0
    %v898 = vadd.f32 %v875, 1.0
    %v899 = vadd.f32 %v877, 1.0
    %v900 = vadd.f32 %v879, 1.0
    %v901 = vadd.f32 %v881, 1.0
    %v902 = vadd.f32 %v883, 1.0
    %v903 = vadd.f32 %v885, 1.0
    %v904 = vadd.f32 %v887, 1.0
    %v905 = vadd.f32 %v889, 1.0
    %v906 = vrcp.pop %v890
    %v907 = vmul.f32 1.0, %v906
    %v908 = vrcp.pop %v891
    %v909 = vmul.f32 1.0, %v908
    %v910 = vrcp.pop %v892
    %v911 = vmul.f32 1.0, %v910
    %v912 = vrcp.pop %v893
    %v913 = vmul.f32 1.0, %v912
    %v914 = vrcp.pop %v894
    %v915 = vmul.f32 1.0, %v914
    %v916 = vrcp.pop %v895
    %v917 = vmul.f32 1.0, %v916
    %v918 = vrcp.pop %v896
    %v919 = vmul.f32 1.0, %v918
    %v920 = vrcp.pop %v897
    %v921 = vmul.f32 1.0, %v920
    %v922 = vrcp.pop %v898
    %v923 = vmul.f32 1.0, %v922
    %v924 = vrcp.pop %v899
    %v925 = vmul.f32 1.0, %v924
    %v926 = vrcp.pop %v900
    %v927 = vmul.f32 1.0, %v926
    %v928 = vrcp.pop %v901
    %v929 = vmul.f32 1.0, %v928
    %v930 = vrcp.pop %v902
    %v931 = vmul.f32 1.0, %v930
    %v932 = vrcp.pop %v903
    %v933 = vmul.f32 1.0, %v932
    %v934 = vrcp.pop %v904
    %v935 = vmul.f32 1.0, %v934
    %v936 = vrcp.pop %v905
    %v937 = vmul.f32 1.0, %v936
    %v954 = vlaneseq
    %v955 = vand.u32 %v954, 127
    %v956 = vlaneseq
    %v957 = vshrl.u32 %v956, 7
    %v958 = vsub.s32 %v955, %v957
    %v959 = vrot.slane %v907, %v958
    %v960 = vadd.s32 %v955, 4294967288
    %v961 = vlaneseq
    %v962 = vshrl.u32 %v961, 7
    %v963 = vsub.s32 %v960, %v962
    %v964 = vrot.slane %v909, %v963
    %vm965 = vcmask 130112
    %v966 = vsel %vm965, %v964, %v959
    %v967 = vadd.s32 %v955, 4294967280
    %v968 = vlaneseq
    %v969 = vshrl.u32 %v968, 7
    %v970 = vsub.s32 %v967, %v969
    %v971 = vrot.slane %v911, %v970
    %vm972 = vcmask 195712
    %v973 = vsel %vm972, %v971, %v966
    %v974 = vadd.s32 %v955, 4294967272
    %v975 = vlaneseq
    %v976 = vshrl.u32 %v975, 7
    %v977 = vsub.s32 %v974, %v976
    %v978 = vrot.slane %v913, %v977
    %vm979 = vcmask 261312
    %v980 = vsel %vm979, %v978, %v973
    %v981 = vadd.s32 %v955, 4294967264
    %v982 = vlaneseq
    %v983 = vshrl.u32 %v982, 7
    %v984 = vsub.s32 %v981, %v983
    %v985 = vrot.slane %v915, %v984
    %vm986 = vcmask 326912
    %v987 = vsel %vm986, %v985, %v980
    %v988 = vadd.s32 %v955, 4294967256
    %v989 = vlaneseq
    %v990 = vshrl.u32 %v989, 7
    %v991 = vsub.s32 %v988, %v990
    %v992 = vrot.slane %v917, %v991
    %vm993 = vcmask 392512
    %v994 = vsel %vm993, %v992, %v987
    %v995 = vadd.s32 %v955, 4294967248
    %v996 = vlaneseq
    %v997 = vshrl.u32 %v996, 7
    %v998 = vsub.s32 %v995, %v997
    %v999 = vrot.slane %v919, %v998
    %vm1000 = vcmask 458112
    %v1001 = vsel %vm1000, %v999, %v994
    %v1002 = vadd.s32 %v955, 4294967240
    %v1003 = vlaneseq
    %v1004 = vshrl.u32 %v1003, 7
    %v1005 = vsub.s32 %v1002, %v1004
    %v1006 = vrot.slane %v921, %v1005
    %vm1007 = vcmask 523712
    %v1008 = vsel %vm1007, %v1006, %v1001
    %v1009 = vadd.s32 %v955, 4294967232
    %v1010 = vlaneseq
    %v1011 = vshrl.u32 %v1010, 7
    %v1012 = vsub.s32 %v1009, %v1011
    %v1013 = vrot.slane %v923, %v1012
    %vm1014 = vcmask 589312
    %v1015 = vsel %vm1014, %v1013, %v1008
    %v1016 = vadd.s32 %v955, 4294967224
    %v1017 = vlaneseq
    %v1018 = vshrl.u32 %v1017, 7
    %v1019 = vsub.s32 %v1016, %v1018
    %v1020 = vrot.slane %v925, %v1019
    %vm1021 = vcmask 654912
    %v1022 = vsel %vm1021, %v1020, %v1015
    %v1023 = vadd.s32 %v955, 4294967216
    %v1024 = vlaneseq
    %v1025 = vshrl.u32 %v1024, 7
    %v1026 = vsub.s32 %v1023, %v1025
    %v1027 = vrot.slane %v927, %v1026
    %vm1028 = vcmask 720512
    %v1029 = vsel %vm1028, %v1027, %v1022
    %v1030 = vadd.s32 %v955, 4294967208
    %v1031 = vlaneseq
    %v1032 = vshrl.u32 %v1031, 7
    %v1033 = vsub.s32 %v1030, %v1032
    %v1034 = vrot.slane %v929, %v1033
    %vm1035 = vcmask 786112
    %v1036 = vsel %vm1035, %v1034, %v1029
    %v1037 = vadd.s32 %v955, 4294967200
    %v1038 = vlaneseq
    %v1039 = vshrl.u32 %v1038, 7
    %v1040 = vsub.s32 %v1037, %v1039
    %v1041 = vrot.slane %v931, %v1040
    %vm1042 = vcmask 851712
    %v1043 = vsel %vm1042, %v1041, %v1036
    %v1044 = vadd.s32 %v955, 4294967192
    %v1045 = vlaneseq
    %v1046 = vshrl.u32 %v1045, 7
    %v1047 = vsub.s32 %v1044, %v1046
    %v1048 = vrot.slane %v933, %v1047
    %vm1049 = vcmask 917312
    %v1050 = vsel %vm1049, %v1048, %v1043
    %v1051 = vadd.s32 %v955, 4294967184
    %v1052 = vlaneseq
    %v1053 = vshrl.u32 %v1052, 7
    %v1054 = vsub.s32 %v1051, %v1053
    %v1055 = vrot.slane %v935, %v1054
    %vm1056 = vcmask 982912
    %v1057 = vsel %vm1056, %v1055, %v1050
    %v1058 = vadd.s32 %v955, 4294967176
    %v1059 = vlaneseq
    %v1060 = vshrl.u32 %v1059, 7
    %v1061 = vsub.s32 %v1058, %v1060
    %v1062 = vrot.slane %v937, %v1061
    %vm1063 = vcmask 1048512
    %v1064 = vsel %vm1063, %v1062, %v1057
    %1066 = vst [vmem:[#allocation14] sm:$0x1] %v1064
    // Predicated region
    $region54: #{tpu_custom_call.1} parent=1 // pred_check
      _
    $region55: #{tpu_custom_call.1} parent=1 // pred_check_branch
      %1068 = sbr.rel (0) target = $region57
    $region56: #{tpu_custom_call.1} parent=1 // pred_region
      %s1070 = ssub.s32 16, 16
      %1071 = vsyncadd [#allocation5], %s1070
      %s1073 = sshll.u32 [#allocation14], 4
      %s1074 = int_to_ptr.vmem [resolvable:$true] %s1073
      %1076 = dma.vmem_to_hbm [thread:$0]  %s1074, 16, %s7, [#allocation5]
    $region57: #{tpu_custom_call.1} parent=1 // pred_fallthru
      _
    // Predicated region
    $region58: #{tpu_custom_call.1} parent=1 // pred_check
      _
    $region59: #{tpu_custom_call.1} parent=1 // pred_check_branch
      %1078 = sbr.rel (0) target = $region61
    $region60: #{tpu_custom_call.1} parent=1 // pred_region
      %1079 = dma.done [#allocation5], 16
    $region61: #{tpu_custom_call.1} parent=1 // pred_fallthru
      _
    %1080 = vsyncpa [#allocation4], 1
    %1081 = vsyncpa [#allocation7], 1
    %1082 = vsyncpa [#allocation10], 1
    %1083 = vsyncpa [#allocation13], 1
    %1084 = vsyncpa [#allocation5], 1

</llo_original>
